<compile_context>
chip_gen: v7x
topology: tpu7x:2x2x1
jax: 0.10.0
libtpu: 0.0.40
codegen_flags: <defaults>
</compile_context>

<pallas_src>
import functools

import jax
import jax.numpy as jnp
from jax import lax
from jax.experimental import pallas as pl
from jax.experimental.pallas import tpu as pltpu


def _round_up(x, m):
    return ((x + m - 1) // m) * m


def _embeddings_kernel(ids_ref,      # SMEM (M_pad,) int32   (scalar prefetch)
                       item_hbm,     # HBM  (V, H_pad)       (memory_space=ANY)
                       pos_ref,      # VMEM (S_pad, H_pad)   (resident)
                       gamma_ref,    # VMEM (1, H_pad) f32   (resident)
                       beta_ref,     # VMEM (1, H_pad) f32   (resident)
                       out_ref,      # VMEM (tm, H_pad)
                       gather_buf,   # VMEM scratch (2, tm, H_pad), item dtype
                       gather_sem,   # DMA semaphores (2,)
                       *, tm, tiles_per_chunk, bps, h_true, eps):
    c = pl.program_id(0)
    t = pl.program_id(1)
    idx = c * tiles_per_chunk + t          # flat row-tile index
    slot = t % 2

    def issue_tile(base, s):
        # tm row gathers from HBM, all signalling one shared semaphore; a
        # single covering wait (below) accounts for the total byte count.
        def body(r, carry):
            row = ids_ref[base + r]
            pltpu.make_async_copy(
                item_hbm.at[pl.ds(row, 1)],
                gather_buf.at[s].at[pl.ds(r, 1)],
                gather_sem.at[s],
            ).start()
            return carry
        lax.fori_loop(0, tm, body, 0, unroll=8)

    # Prime the pipeline at the start of every sequential chunk.
    @pl.when(t == 0)
    def _():
        issue_tile(idx * tm, slot)

    # Look-ahead: start gathering the NEXT tile (reads next-tile ids from SMEM
    # before the wait) so its DMA overlaps this tile's LayerNorm compute.
    @pl.when(t + 1 < tiles_per_chunk)
    def _():
        issue_tile((idx + 1) * tm, (t + 1) % 2)

    # Single covering wait for all tm row copies of the current slot.
    pltpu.make_async_copy(gather_buf.at[slot], gather_buf.at[slot],
                          gather_sem.at[slot]).wait()

    pos_off = pl.multiple_of((idx % bps) * tm, 8)
    x = (gather_buf[slot].astype(jnp.float32)
         + pos_ref[pl.ds(pos_off, tm), :].astype(jnp.float32))

    # TF-style LayerNorm over the TRUE hidden width (padded lanes are zero so
    # they do not perturb the sums); clamp variance against cancellation.
    inv_h = 1.0 / float(h_true)
    mean = jnp.sum(x, axis=-1, keepdims=True) * inv_h
    var = jnp.sum(x * x, axis=-1, keepdims=True) * inv_h - mean * mean
    var = jnp.maximum(var, 0.0)
    inv = lax.rsqrt(var + eps)
    y = (x - mean) * inv

    # dropout: inference mode -> identity.
    # TODO(synk): training-mode dropout (hidden_dropout_prob) not applied.
    out_ref[...] = (gamma_ref[...] * y + beta_ref[...]).astype(out_ref.dtype)


def embeddings_forward(input_ids, item_table, pos_table, gamma, beta,
                       *, eps=1e-12, block_rows=512):
    """input_ids: (B, S) int. item_table: (V, H). pos_table: (>=S, H).
    Returns (B, S, H) in item_table.dtype."""
    B, S = input_ids.shape
    V, H = item_table.shape
    out_dtype = item_table.dtype
    item_bytes = jnp.dtype(item_table.dtype).itemsize
    out_bytes = jnp.dtype(out_dtype).itemsize

    # Lane-dense hidden dim: pad H to a multiple of 128.
    H_pad = _round_up(H, 128)

    # Row tile: multiple of 8 sublanes; shrink to keep the VMEM footprint
    # under ~40 MiB (safe on v7x's 64 MiB VMEM; v5e/v6e have headroom).
    budget = 40 << 20
    tm = max(8, min(_round_up(block_rows, 8), _round_up(S, 8)))
    while tm > 8:
        s_pad = _round_up(S, tm)
        footprint = (2 * tm * H_pad * item_bytes      # gather double buffer
                     + 2 * tm * H_pad * out_bytes     # pipelined output
                     + 2 * s_pad * H_pad * item_bytes  # resident position rows
                     + 4 * tm * H_pad * 4)            # f32 temporaries margin
        if footprint <= budget:
            break
        tm = max(8, ((tm // 2) // 8) * 8)
    S_pad = _round_up(S, tm)             # padded sequence length
    bps = S_pad // tm                    # position tiles per sequence
    M_pad = B * S_pad
    num_tiles = M_pad // tm

    # Two-level grid: outer axis is "parallel" (v7x megacore split), inner axis
    # is "arbitrary" and carries the cross-step gather double buffer.
    num_chunks = 2 if (num_tiles % 2 == 0 and num_tiles >= 2) else 1
    tiles_per_chunk = num_tiles // num_chunks

    # Clamp ids defensively and pad sequences with id 0 (the padding_idx row).
    ids = jnp.clip(input_ids.astype(jnp.int32), 0, V - 1)
    ids = jnp.pad(ids, ((0, 0), (0, S_pad - S)))
    ids_flat = ids.reshape(M_pad)

    item_p = jnp.pad(item_table, ((0, 0), (0, H_pad - H)))
    pos_p = jnp.pad(pos_table[:S].astype(item_table.dtype),
                    ((0, S_pad - S), (0, H_pad - H)))
    gamma2 = jnp.pad(gamma.astype(jnp.float32), (0, H_pad - H)).reshape(1, H_pad)
    beta2 = jnp.pad(beta.astype(jnp.float32), (0, H_pad - H)).reshape(1, H_pad)

    kernel = functools.partial(_embeddings_kernel, tm=tm,
                               tiles_per_chunk=tiles_per_chunk, bps=bps,
                               h_true=H, eps=eps)

    pos_bytes = jnp.dtype(pos_p.dtype).itemsize
    vmem_need = (2 * tm * H_pad * item_bytes + 2 * tm * H_pad * out_bytes
                 + 2 * S_pad * H_pad * pos_bytes + 4 * tm * H_pad * 4
                 + (1 << 20))
    vmem_limit = int(min(max(vmem_need, 16 << 20), 48 << 20))

    out2d = pl.pallas_call(
        kernel,
        out_shape=jax.ShapeDtypeStruct((M_pad, H_pad), out_dtype),
        grid_spec=pltpu.PrefetchScalarGridSpec(
            num_scalar_prefetch=1,
            grid=(num_chunks, tiles_per_chunk),
            in_specs=[
                pl.BlockSpec(memory_space=pl.ANY),                       # item table (HBM)
                pl.BlockSpec((S_pad, H_pad), lambda c, t, ids: (0, 0)),  # pos (resident)
                pl.BlockSpec((1, H_pad), lambda c, t, ids: (0, 0)),      # gamma
                pl.BlockSpec((1, H_pad), lambda c, t, ids: (0, 0)),      # beta
            ],
            out_specs=pl.BlockSpec(
                (tm, H_pad),
                lambda c, t, ids: (c * tiles_per_chunk + t, 0)),
            scratch_shapes=[
                pltpu.VMEM((2, tm, H_pad), item_table.dtype),
                pltpu.SemaphoreType.DMA((2,)),
            ],
        ),
        compiler_params=pltpu.CompilerParams(
            dimension_semantics=("parallel", "arbitrary"),
            vmem_limit_bytes=vmem_limit,
        ),
        cost_estimate=pl.CostEstimate(
            flops=10 * M_pad * H_pad,
            transcendentals=M_pad,
            bytes_accessed=(M_pad * H_pad * (item_bytes + out_bytes)
                            + S_pad * H_pad * pos_bytes + 4 * M_pad),
        ),
    )(ids_flat, item_p, pos_p, gamma2, beta2)

    return out2d.reshape(B, S_pad, H_pad)[:, :S, :H]


def _reference(input_ids, item_table, pos_table, gamma, beta, eps=1e-12):
    B, S = input_ids.shape
    items = item_table[input_ids]                       # (B, S, H)
    pos = pos_table[jnp.arange(S)][None, :, :]          # (1, S, H)
    x = items + pos
    u = jnp.mean(x, axis=-1, keepdims=True)
    s = jnp.mean((x - u) ** 2, axis=-1, keepdims=True)
    xn = (x - u) / jnp.sqrt(s + eps)
    return gamma * xn + beta


if __name__ == "__main__":
    B, S, H = 2, 8, 32
    item_size, max_seq_length = 64, 16

    key = jax.random.PRNGKey(0)
    k_ids, k_item, k_pos, k_g, k_b = jax.random.split(key, 5)

    input_ids = jax.random.randint(k_ids, (B, S), 0, item_size, dtype=jnp.int32)
    item_table = jax.random.normal(k_item, (item_size, H), dtype=jnp.float32) * 0.02
    item_table = item_table.at[0].set(0.0)   # padding_idx=0 row is zeros
    pos_table = jax.random.normal(k_pos, (max_seq_length, H), dtype=jnp.float32) * 0.02
    gamma = 1.0 + 0.1 * jax.random.normal(k_g, (H,), dtype=jnp.float32)
    beta = 0.1 * jax.random.normal(k_b, (H,), dtype=jnp.float32)

    out = embeddings_forward(input_ids, item_table, pos_table, gamma, beta)
    out = jax.block_until_ready(out)

    ref = _reference(input_ids, item_table, pos_table, gamma, beta)
    assert out.shape == (B, S, H)
    err = float(jnp.max(jnp.abs(out - ref)))
    assert jnp.allclose(out, ref, atol=1e-4, rtol=1e-4), err
    print("KERNEL_OK")
</pallas_src>

<mosaic_0001>
module attributes {stable_mosaic.version = 11 : i64} {
  func.func @_embeddings_kernel(%arg0: i32, %arg1: i32, %arg2: memref<16xi32, #tpu.memory_space<smem>>, %arg3: memref<64x128xf32, #tpu.memory_space<any>>, %arg4: memref<8x128xf32, #tpu.memory_space<vmem>>, %arg5: memref<1x128xf32, #tpu.memory_space<vmem>>, %arg6: memref<1x128xf32, #tpu.memory_space<vmem>>, %arg7: memref<8x128xf32, #tpu.memory_space<vmem>>, %arg8: memref<2x8x128xf32, #tpu.memory_space<vmem>>, %arg9: memref<2x!tpu.dma_semaphore, #tpu.memory_space<semaphore_mem>>) attributes {dimension_semantics = [#tpu.dimension_semantics<parallel>, #tpu.dimension_semantics<arbitrary>], iteration_bounds = array<i64: 2, 1>, scalar_prefetch = 1 : i64, scratch_operands = 2 : i64, tpu.core_type = #tpu.core_type<tc>, window_params = [{}, {pipeline_mode = #tpu.pipeline_mode<synchronous>, transform_indices = @transform_1, window_bounds = array<i64: 8, 128>}, {pipeline_mode = #tpu.pipeline_mode<synchronous>, transform_indices = @transform_2, window_bounds = array<i64: 1, 128>}, {pipeline_mode = #tpu.pipeline_mode<synchronous>, transform_indices = @transform_3, window_bounds = array<i64: 1, 128>}, {transform_indices = @transform_4, window_bounds = array<i64: 8, 128>}]} {
    %c1_i32 = arith.constant 1 : i32
    %0 = arith.muli %arg0, %c1_i32 : i32
    %1 = arith.addi %0, %arg1 : i32
    %c2_i32 = arith.constant 2 : i32
    %c0_i32 = arith.constant 0 : i32
    %2 = arith.cmpi eq, %c2_i32, %c0_i32 : i32
    %c1_i32_0 = arith.constant 1 : i32
    %3 = arith.select %2, %c1_i32_0, %c2_i32 : i32
    %4 = arith.remsi %arg1, %3 : i32
    %c0_i32_1 = arith.constant 0 : i32
    %5 = arith.cmpi ne, %4, %c0_i32_1 : i32
    %c0_i32_2 = arith.constant 0 : i32
    %6 = arith.cmpi slt, %4, %c0_i32_2 : i32
    %c0_i32_3 = arith.constant 0 : i32
    %7 = arith.cmpi slt, %3, %c0_i32_3 : i32
    %8 = arith.xori %6, %7 : i1
    %9 = arith.andi %8, %5 : i1
    %10 = arith.addi %4, %3 : i32
    %11 = arith.select %9, %10, %4 : i32
    %c0_i32_4 = arith.constant 0 : i32
    %12 = arith.cmpi eq, %arg1, %c0_i32_4 : i32
    %13 = arith.extui %12 : i1 to i32
    %c0_i32_5 = arith.constant 0 : i32
    %14 = arith.cmpi ne, %13, %c0_i32_5 : i32
    scf.if %14 {
      %c8_i32_32 = arith.constant 8 : i32
      %70 = arith.muli %1, %c8_i32_32 : i32
      %c0_i32_33 = arith.constant 0 : i32
      %71 = arith.addi %70, %c0_i32_33 : i32
      %72 = arith.index_cast %71 : i32 to index
      %73 = memref.load %arg2[%72] : memref<16xi32, #tpu.memory_space<smem>>
      %c0_i32_34 = arith.constant 0 : i32
      %74 = tpu.memref_slice %arg3[%73, %c0_i32_34] : memref<64x128xf32, #tpu.memory_space<any>> -> memref<1x128xf32, #tpu.memory_space<any>>
      %c0_i32_35 = arith.constant 0 : i32
      %c0_i32_36 = arith.constant 0 : i32
      %75 = tpu.memref_slice %arg8[%11, %c0_i32_35, %c0_i32_36] : memref<2x8x128xf32, #tpu.memory_space<vmem>> -> memref<1x8x128xf32, #tpu.memory_space<vmem>>
      %76 = tpu.memref_squeeze %75 : memref<1x8x128xf32, #tpu.memory_space<vmem>> -> memref<8x128xf32, #tpu.memory_space<vmem>>
      %c0_i32_37 = arith.constant 0 : i32
      %77 = tpu.memref_slice %76[%c0_i32_33, %c0_i32_37] : memref<8x128xf32, #tpu.memory_space<vmem>> -> memref<1x128xf32, #tpu.memory_space<vmem>>
      %78 = tpu.memref_slice %arg9[%11] : memref<2x!tpu.dma_semaphore, #tpu.memory_space<semaphore_mem>> -> memref<1x!tpu.dma_semaphore, #tpu.memory_space<semaphore_mem>>
      %79 = tpu.memref_squeeze %78 : memref<1x!tpu.dma_semaphore, #tpu.memory_space<semaphore_mem>> -> memref<!tpu.dma_semaphore, #tpu.memory_space<semaphore_mem>>
      tpu.enqueue_dma source(%74 : memref<1x128xf32, #tpu.memory_space<any>>) target(%77 : memref<1x128xf32, #tpu.memory_space<vmem>>) target_semaphore(%79 : memref<!tpu.dma_semaphore, #tpu.memory_space<semaphore_mem>>)
      %c1_i32_38 = arith.constant 1 : i32
      %80 = arith.addi %70, %c1_i32_38 : i32
      %81 = arith.index_cast %80 : i32 to index
      %82 = memref.load %arg2[%81] : memref<16xi32, #tpu.memory_space<smem>>
      %c0_i32_39 = arith.constant 0 : i32
      %83 = tpu.memref_slice %arg3[%82, %c0_i32_39] : memref<64x128xf32, #tpu.memory_space<any>> -> memref<1x128xf32, #tpu.memory_space<any>>
      %c0_i32_40 = arith.constant 0 : i32
      %c0_i32_41 = arith.constant 0 : i32
      %84 = tpu.memref_slice %arg8[%11, %c0_i32_40, %c0_i32_41] : memref<2x8x128xf32, #tpu.memory_space<vmem>> -> memref<1x8x128xf32, #tpu.memory_space<vmem>>
      %85 = tpu.memref_squeeze %84 : memref<1x8x128xf32, #tpu.memory_space<vmem>> -> memref<8x128xf32, #tpu.memory_space<vmem>>
      %c0_i32_42 = arith.constant 0 : i32
      %86 = tpu.memref_slice %85[%c1_i32_38, %c0_i32_42] : memref<8x128xf32, #tpu.memory_space<vmem>> -> memref<1x128xf32, #tpu.memory_space<vmem>>
      %87 = tpu.memref_slice %arg9[%11] : memref<2x!tpu.dma_semaphore, #tpu.memory_space<semaphore_mem>> -> memref<1x!tpu.dma_semaphore, #tpu.memory_space<semaphore_mem>>
      %88 = tpu.memref_squeeze %87 : memref<1x!tpu.dma_semaphore, #tpu.memory_space<semaphore_mem>> -> memref<!tpu.dma_semaphore, #tpu.memory_space<semaphore_mem>>
      tpu.enqueue_dma source(%83 : memref<1x128xf32, #tpu.memory_space<any>>) target(%86 : memref<1x128xf32, #tpu.memory_space<vmem>>) target_semaphore(%88 : memref<!tpu.dma_semaphore, #tpu.memory_space<semaphore_mem>>)
      %c2_i32_43 = arith.constant 2 : i32
      %89 = arith.addi %70, %c2_i32_43 : i32
      %90 = arith.index_cast %89 : i32 to index
      %91 = memref.load %arg2[%90] : memref<16xi32, #tpu.memory_space<smem>>
      %c0_i32_44 = arith.constant 0 : i32
      %92 = tpu.memref_slice %arg3[%91, %c0_i32_44] : memref<64x128xf32, #tpu.memory_space<any>> -> memref<1x128xf32, #tpu.memory_space<any>>
      %c0_i32_45 = arith.constant 0 : i32
      %c0_i32_46 = arith.constant 0 : i32
      %93 = tpu.memref_slice %arg8[%11, %c0_i32_45, %c0_i32_46] : memref<2x8x128xf32, #tpu.memory_space<vmem>> -> memref<1x8x128xf32, #tpu.memory_space<vmem>>
      %94 = tpu.memref_squeeze %93 : memref<1x8x128xf32, #tpu.memory_space<vmem>> -> memref<8x128xf32, #tpu.memory_space<vmem>>
      %c0_i32_47 = arith.constant 0 : i32
      %95 = tpu.memref_slice %94[%c2_i32_43, %c0_i32_47] : memref<8x128xf32, #tpu.memory_space<vmem>> -> memref<1x128xf32, #tpu.memory_space<vmem>>
      %96 = tpu.memref_slice %arg9[%11] : memref<2x!tpu.dma_semaphore, #tpu.memory_space<semaphore_mem>> -> memref<1x!tpu.dma_semaphore, #tpu.memory_space<semaphore_mem>>
      %97 = tpu.memref_squeeze %96 : memref<1x!tpu.dma_semaphore, #tpu.memory_space<semaphore_mem>> -> memref<!tpu.dma_semaphore, #tpu.memory_space<semaphore_mem>>
      tpu.enqueue_dma source(%92 : memref<1x128xf32, #tpu.memory_space<any>>) target(%95 : memref<1x128xf32, #tpu.memory_space<vmem>>) target_semaphore(%97 : memref<!tpu.dma_semaphore, #tpu.memory_space<semaphore_mem>>)
      %c3_i32 = arith.constant 3 : i32
      %98 = arith.addi %70, %c3_i32 : i32
      %99 = arith.index_cast %98 : i32 to index
      %100 = memref.load %arg2[%99] : memref<16xi32, #tpu.memory_space<smem>>
      %c0_i32_48 = arith.constant 0 : i32
      %101 = tpu.memref_slice %arg3[%100, %c0_i32_48] : memref<64x128xf32, #tpu.memory_space<any>> -> memref<1x128xf32, #tpu.memory_space<any>>
      %c0_i32_49 = arith.constant 0 : i32
      %c0_i32_50 = arith.constant 0 : i32
      %102 = tpu.memref_slice %arg8[%11, %c0_i32_49, %c0_i32_50] : memref<2x8x128xf32, #tpu.memory_space<vmem>> -> memref<1x8x128xf32, #tpu.memory_space<vmem>>
      %103 = tpu.memref_squeeze %102 : memref<1x8x128xf32, #tpu.memory_space<vmem>> -> memref<8x128xf32, #tpu.memory_space<vmem>>
      %c0_i32_51 = arith.constant 0 : i32
      %104 = tpu.memref_slice %103[%c3_i32, %c0_i32_51] : memref<8x128xf32, #tpu.memory_space<vmem>> -> memref<1x128xf32, #tpu.memory_space<vmem>>
      %105 = tpu.memref_slice %arg9[%11] : memref<2x!tpu.dma_semaphore, #tpu.memory_space<semaphore_mem>> -> memref<1x!tpu.dma_semaphore, #tpu.memory_space<semaphore_mem>>
      %106 = tpu.memref_squeeze %105 : memref<1x!tpu.dma_semaphore, #tpu.memory_space<semaphore_mem>> -> memref<!tpu.dma_semaphore, #tpu.memory_space<semaphore_mem>>
      tpu.enqueue_dma source(%101 : memref<1x128xf32, #tpu.memory_space<any>>) target(%104 : memref<1x128xf32, #tpu.memory_space<vmem>>) target_semaphore(%106 : memref<!tpu.dma_semaphore, #tpu.memory_space<semaphore_mem>>)
      %c4_i32 = arith.constant 4 : i32
      %107 = arith.addi %70, %c4_i32 : i32
      %108 = arith.index_cast %107 : i32 to index
      %109 = memref.load %arg2[%108] : memref<16xi32, #tpu.memory_space<smem>>
      %c0_i32_52 = arith.constant 0 : i32
      %110 = tpu.memref_slice %arg3[%109, %c0_i32_52] : memref<64x128xf32, #tpu.memory_space<any>> -> memref<1x128xf32, #tpu.memory_space<any>>
      %c0_i32_53 = arith.constant 0 : i32
      %c0_i32_54 = arith.constant 0 : i32
      %111 = tpu.memref_slice %arg8[%11, %c0_i32_53, %c0_i32_54] : memref<2x8x128xf32, #tpu.memory_space<vmem>> -> memref<1x8x128xf32, #tpu.memory_space<vmem>>
      %112 = tpu.memref_squeeze %111 : memref<1x8x128xf32, #tpu.memory_space<vmem>> -> memref<8x128xf32, #tpu.memory_space<vmem>>
      %c0_i32_55 = arith.constant 0 : i32
      %113 = tpu.memref_slice %112[%c4_i32, %c0_i32_55] : memref<8x128xf32, #tpu.memory_space<vmem>> -> memref<1x128xf32, #tpu.memory_space<vmem>>
      %114 = tpu.memref_slice %arg9[%11] : memref<2x!tpu.dma_semaphore, #tpu.memory_space<semaphore_mem>> -> memref<1x!tpu.dma_semaphore, #tpu.memory_space<semaphore_mem>>
      %115 = tpu.memref_squeeze %114 : memref<1x!tpu.dma_semaphore, #tpu.memory_space<semaphore_mem>> -> memref<!tpu.dma_semaphore, #tpu.memory_space<semaphore_mem>>
      tpu.enqueue_dma source(%110 : memref<1x128xf32, #tpu.memory_space<any>>) target(%113 : memref<1x128xf32, #tpu.memory_space<vmem>>) target_semaphore(%115 : memref<!tpu.dma_semaphore, #tpu.memory_space<semaphore_mem>>)
      %c5_i32 = arith.constant 5 : i32
      %116 = arith.addi %70, %c5_i32 : i32
      %117 = arith.index_cast %116 : i32 to index
      %118 = memref.load %arg2[%117] : memref<16xi32, #tpu.memory_space<smem>>
      %c0_i32_56 = arith.constant 0 : i32
      %119 = tpu.memref_slice %arg3[%118, %c0_i32_56] : memref<64x128xf32, #tpu.memory_space<any>> -> memref<1x128xf32, #tpu.memory_space<any>>
      %c0_i32_57 = arith.constant 0 : i32
      %c0_i32_58 = arith.constant 0 : i32
      %120 = tpu.memref_slice %arg8[%11, %c0_i32_57, %c0_i32_58] : memref<2x8x128xf32, #tpu.memory_space<vmem>> -> memref<1x8x128xf32, #tpu.memory_space<vmem>>
      %121 = tpu.memref_squeeze %120 : memref<1x8x128xf32, #tpu.memory_space<vmem>> -> memref<8x128xf32, #tpu.memory_space<vmem>>
      %c0_i32_59 = arith.constant 0 : i32
      %122 = tpu.memref_slice %121[%c5_i32, %c0_i32_59] : memref<8x128xf32, #tpu.memory_space<vmem>> -> memref<1x128xf32, #tpu.memory_space<vmem>>
      %123 = tpu.memref_slice %arg9[%11] : memref<2x!tpu.dma_semaphore, #tpu.memory_space<semaphore_mem>> -> memref<1x!tpu.dma_semaphore, #tpu.memory_space<semaphore_mem>>
      %124 = tpu.memref_squeeze %123 : memref<1x!tpu.dma_semaphore, #tpu.memory_space<semaphore_mem>> -> memref<!tpu.dma_semaphore, #tpu.memory_space<semaphore_mem>>
      tpu.enqueue_dma source(%119 : memref<1x128xf32, #tpu.memory_space<any>>) target(%122 : memref<1x128xf32, #tpu.memory_space<vmem>>) target_semaphore(%124 : memref<!tpu.dma_semaphore, #tpu.memory_space<semaphore_mem>>)
      %c6_i32 = arith.constant 6 : i32
      %125 = arith.addi %70, %c6_i32 : i32
      %126 = arith.index_cast %125 : i32 to index
      %127 = memref.load %arg2[%126] : memref<16xi32, #tpu.memory_space<smem>>
      %c0_i32_60 = arith.constant 0 : i32
      %128 = tpu.memref_slice %arg3[%127, %c0_i32_60] : memref<64x128xf32, #tpu.memory_space<any>> -> memref<1x128xf32, #tpu.memory_space<any>>
      %c0_i32_61 = arith.constant 0 : i32
      %c0_i32_62 = arith.constant 0 : i32
      %129 = tpu.memref_slice %arg8[%11, %c0_i32_61, %c0_i32_62] : memref<2x8x128xf32, #tpu.memory_space<vmem>> -> memref<1x8x128xf32, #tpu.memory_space<vmem>>
      %130 = tpu.memref_squeeze %129 : memref<1x8x128xf32, #tpu.memory_space<vmem>> -> memref<8x128xf32, #tpu.memory_space<vmem>>
      %c0_i32_63 = arith.constant 0 : i32
      %131 = tpu.memref_slice %130[%c6_i32, %c0_i32_63] : memref<8x128xf32, #tpu.memory_space<vmem>> -> memref<1x128xf32, #tpu.memory_space<vmem>>
      %132 = tpu.memref_slice %arg9[%11] : memref<2x!tpu.dma_semaphore, #tpu.memory_space<semaphore_mem>> -> memref<1x!tpu.dma_semaphore, #tpu.memory_space<semaphore_mem>>
      %133 = tpu.memref_squeeze %132 : memref<1x!tpu.dma_semaphore, #tpu.memory_space<semaphore_mem>> -> memref<!tpu.dma_semaphore, #tpu.memory_space<semaphore_mem>>
      tpu.enqueue_dma source(%128 : memref<1x128xf32, #tpu.memory_space<any>>) target(%131 : memref<1x128xf32, #tpu.memory_space<vmem>>) target_semaphore(%133 : memref<!tpu.dma_semaphore, #tpu.memory_space<semaphore_mem>>)
      %c7_i32 = arith.constant 7 : i32
      %134 = arith.addi %70, %c7_i32 : i32
      %135 = arith.index_cast %134 : i32 to index
      %136 = memref.load %arg2[%135] : memref<16xi32, #tpu.memory_space<smem>>
      %c0_i32_64 = arith.constant 0 : i32
      %137 = tpu.memref_slice %arg3[%136, %c0_i32_64] : memref<64x128xf32, #tpu.memory_space<any>> -> memref<1x128xf32, #tpu.memory_space<any>>
      %c0_i32_65 = arith.constant 0 : i32
      %c0_i32_66 = arith.constant 0 : i32
      %138 = tpu.memref_slice %arg8[%11, %c0_i32_65, %c0_i32_66] : memref<2x8x128xf32, #tpu.memory_space<vmem>> -> memref<1x8x128xf32, #tpu.memory_space<vmem>>
      %139 = tpu.memref_squeeze %138 : memref<1x8x128xf32, #tpu.memory_space<vmem>> -> memref<8x128xf32, #tpu.memory_space<vmem>>
      %c0_i32_67 = arith.constant 0 : i32
      %140 = tpu.memref_slice %139[%c7_i32, %c0_i32_67] : memref<8x128xf32, #tpu.memory_space<vmem>> -> memref<1x128xf32, #tpu.memory_space<vmem>>
      %141 = tpu.memref_slice %arg9[%11] : memref<2x!tpu.dma_semaphore, #tpu.memory_space<semaphore_mem>> -> memref<1x!tpu.dma_semaphore, #tpu.memory_space<semaphore_mem>>
      %142 = tpu.memref_squeeze %141 : memref<1x!tpu.dma_semaphore, #tpu.memory_space<semaphore_mem>> -> memref<!tpu.dma_semaphore, #tpu.memory_space<semaphore_mem>>
      tpu.enqueue_dma source(%137 : memref<1x128xf32, #tpu.memory_space<any>>) target(%140 : memref<1x128xf32, #tpu.memory_space<vmem>>) target_semaphore(%142 : memref<!tpu.dma_semaphore, #tpu.memory_space<semaphore_mem>>)
      %c8_i32_68 = arith.constant 8 : i32
    } else {
    }
    %c1_i32_6 = arith.constant 1 : i32
    %15 = arith.addi %arg1, %c1_i32_6 : i32
    %c1_i32_7 = arith.constant 1 : i32
    %16 = arith.cmpi slt, %15, %c1_i32_7 : i32
    %17 = arith.extui %16 : i1 to i32
    %c0_i32_8 = arith.constant 0 : i32
    %18 = arith.cmpi ne, %17, %c0_i32_8 : i32
    scf.if %18 {
      %c1_i32_32 = arith.constant 1 : i32
      %70 = arith.addi %1, %c1_i32_32 : i32
      %c8_i32_33 = arith.constant 8 : i32
      %71 = arith.muli %70, %c8_i32_33 : i32
      %c1_i32_34 = arith.constant 1 : i32
      %72 = arith.addi %arg1, %c1_i32_34 : i32
      %c2_i32_35 = arith.constant 2 : i32
      %c0_i32_36 = arith.constant 0 : i32
      %73 = arith.cmpi eq, %c2_i32_35, %c0_i32_36 : i32
      %c1_i32_37 = arith.constant 1 : i32
      %74 = arith.select %73, %c1_i32_37, %c2_i32_35 : i32
      %75 = arith.remsi %72, %74 : i32
      %c0_i32_38 = arith.constant 0 : i32
      %76 = arith.cmpi ne, %75, %c0_i32_38 : i32
      %c0_i32_39 = arith.constant 0 : i32
      %77 = arith.cmpi slt, %75, %c0_i32_39 : i32
      %c0_i32_40 = arith.constant 0 : i32
      %78 = arith.cmpi slt, %74, %c0_i32_40 : i32
      %79 = arith.xori %77, %78 : i1
      %80 = arith.andi %79, %76 : i1
      %81 = arith.addi %75, %74 : i32
      %82 = arith.select %80, %81, %75 : i32
      %c0_i32_41 = arith.constant 0 : i32
      %83 = arith.addi %71, %c0_i32_41 : i32
      %84 = arith.index_cast %83 : i32 to index
      %85 = memref.load %arg2[%84] : memref<16xi32, #tpu.memory_space<smem>>
      %c0_i32_42 = arith.constant 0 : i32
      %86 = tpu.memref_slice %arg3[%85, %c0_i32_42] : memref<64x128xf32, #tpu.memory_space<any>> -> memref<1x128xf32, #tpu.memory_space<any>>
      %c0_i32_43 = arith.constant 0 : i32
      %c0_i32_44 = arith.constant 0 : i32
      %87 = tpu.memref_slice %arg8[%82, %c0_i32_43, %c0_i32_44] : memref<2x8x128xf32, #tpu.memory_space<vmem>> -> memref<1x8x128xf32, #tpu.memory_space<vmem>>
      %88 = tpu.memref_squeeze %87 : memref<1x8x128xf32, #tpu.memory_space<vmem>> -> memref<8x128xf32, #tpu.memory_space<vmem>>
      %c0_i32_45 = arith.constant 0 : i32
      %89 = tpu.memref_slice %88[%c0_i32_41, %c0_i32_45] : memref<8x128xf32, #tpu.memory_space<vmem>> -> memref<1x128xf32, #tpu.memory_space<vmem>>
      %90 = tpu.memref_slice %arg9[%82] : memref<2x!tpu.dma_semaphore, #tpu.memory_space<semaphore_mem>> -> memref<1x!tpu.dma_semaphore, #tpu.memory_space<semaphore_mem>>
      %91 = tpu.memref_squeeze %90 : memref<1x!tpu.dma_semaphore, #tpu.memory_space<semaphore_mem>> -> memref<!tpu.dma_semaphore, #tpu.memory_space<semaphore_mem>>
      tpu.enqueue_dma source(%86 : memref<1x128xf32, #tpu.memory_space<any>>) target(%89 : memref<1x128xf32, #tpu.memory_space<vmem>>) target_semaphore(%91 : memref<!tpu.dma_semaphore, #tpu.memory_space<semaphore_mem>>)
      %c1_i32_46 = arith.constant 1 : i32
      %92 = arith.addi %71, %c1_i32_46 : i32
      %93 = arith.index_cast %92 : i32 to index
      %94 = memref.load %arg2[%93] : memref<16xi32, #tpu.memory_space<smem>>
      %c0_i32_47 = arith.constant 0 : i32
      %95 = tpu.memref_slice %arg3[%94, %c0_i32_47] : memref<64x128xf32, #tpu.memory_space<any>> -> memref<1x128xf32, #tpu.memory_space<any>>
      %c0_i32_48 = arith.constant 0 : i32
      %c0_i32_49 = arith.constant 0 : i32
      %96 = tpu.memref_slice %arg8[%82, %c0_i32_48, %c0_i32_49] : memref<2x8x128xf32, #tpu.memory_space<vmem>> -> memref<1x8x128xf32, #tpu.memory_space<vmem>>
      %97 = tpu.memref_squeeze %96 : memref<1x8x128xf32, #tpu.memory_space<vmem>> -> memref<8x128xf32, #tpu.memory_space<vmem>>
      %c0_i32_50 = arith.constant 0 : i32
      %98 = tpu.memref_slice %97[%c1_i32_46, %c0_i32_50] : memref<8x128xf32, #tpu.memory_space<vmem>> -> memref<1x128xf32, #tpu.memory_space<vmem>>
      %99 = tpu.memref_slice %arg9[%82] : memref<2x!tpu.dma_semaphore, #tpu.memory_space<semaphore_mem>> -> memref<1x!tpu.dma_semaphore, #tpu.memory_space<semaphore_mem>>
      %100 = tpu.memref_squeeze %99 : memref<1x!tpu.dma_semaphore, #tpu.memory_space<semaphore_mem>> -> memref<!tpu.dma_semaphore, #tpu.memory_space<semaphore_mem>>
      tpu.enqueue_dma source(%95 : memref<1x128xf32, #tpu.memory_space<any>>) target(%98 : memref<1x128xf32, #tpu.memory_space<vmem>>) target_semaphore(%100 : memref<!tpu.dma_semaphore, #tpu.memory_space<semaphore_mem>>)
      %c2_i32_51 = arith.constant 2 : i32
      %101 = arith.addi %71, %c2_i32_51 : i32
      %102 = arith.index_cast %101 : i32 to index
      %103 = memref.load %arg2[%102] : memref<16xi32, #tpu.memory_space<smem>>
      %c0_i32_52 = arith.constant 0 : i32
      %104 = tpu.memref_slice %arg3[%103, %c0_i32_52] : memref<64x128xf32, #tpu.memory_space<any>> -> memref<1x128xf32, #tpu.memory_space<any>>
      %c0_i32_53 = arith.constant 0 : i32
      %c0_i32_54 = arith.constant 0 : i32
      %105 = tpu.memref_slice %arg8[%82, %c0_i32_53, %c0_i32_54] : memref<2x8x128xf32, #tpu.memory_space<vmem>> -> memref<1x8x128xf32, #tpu.memory_space<vmem>>
      %106 = tpu.memref_squeeze %105 : memref<1x8x128xf32, #tpu.memory_space<vmem>> -> memref<8x128xf32, #tpu.memory_space<vmem>>
      %c0_i32_55 = arith.constant 0 : i32
      %107 = tpu.memref_slice %106[%c2_i32_51, %c0_i32_55] : memref<8x128xf32, #tpu.memory_space<vmem>> -> memref<1x128xf32, #tpu.memory_space<vmem>>
      %108 = tpu.memref_slice %arg9[%82] : memref<2x!tpu.dma_semaphore, #tpu.memory_space<semaphore_mem>> -> memref<1x!tpu.dma_semaphore, #tpu.memory_space<semaphore_mem>>
      %109 = tpu.memref_squeeze %108 : memref<1x!tpu.dma_semaphore, #tpu.memory_space<semaphore_mem>> -> memref<!tpu.dma_semaphore, #tpu.memory_space<semaphore_mem>>
      tpu.enqueue_dma source(%104 : memref<1x128xf32, #tpu.memory_space<any>>) target(%107 : memref<1x128xf32, #tpu.memory_space<vmem>>) target_semaphore(%109 : memref<!tpu.dma_semaphore, #tpu.memory_space<semaphore_mem>>)
      %c3_i32 = arith.constant 3 : i32
      %110 = arith.addi %71, %c3_i32 : i32
      %111 = arith.index_cast %110 : i32 to index
      %112 = memref.load %arg2[%111] : memref<16xi32, #tpu.memory_space<smem>>
      %c0_i32_56 = arith.constant 0 : i32
      %113 = tpu.memref_slice %arg3[%112, %c0_i32_56] : memref<64x128xf32, #tpu.memory_space<any>> -> memref<1x128xf32, #tpu.memory_space<any>>
      %c0_i32_57 = arith.constant 0 : i32
      %c0_i32_58 = arith.constant 0 : i32
      %114 = tpu.memref_slice %arg8[%82, %c0_i32_57, %c0_i32_58] : memref<2x8x128xf32, #tpu.memory_space<vmem>> -> memref<1x8x128xf32, #tpu.memory_space<vmem>>
      %115 = tpu.memref_squeeze %114 : memref<1x8x128xf32, #tpu.memory_space<vmem>> -> memref<8x128xf32, #tpu.memory_space<vmem>>
      %c0_i32_59 = arith.constant 0 : i32
      %116 = tpu.memref_slice %115[%c3_i32, %c0_i32_59] : memref<8x128xf32, #tpu.memory_space<vmem>> -> memref<1x128xf32, #tpu.memory_space<vmem>>
      %117 = tpu.memref_slice %arg9[%82] : memref<2x!tpu.dma_semaphore, #tpu.memory_space<semaphore_mem>> -> memref<1x!tpu.dma_semaphore, #tpu.memory_space<semaphore_mem>>
      %118 = tpu.memref_squeeze %117 : memref<1x!tpu.dma_semaphore, #tpu.memory_space<semaphore_mem>> -> memref<!tpu.dma_semaphore, #tpu.memory_space<semaphore_mem>>
      tpu.enqueue_dma source(%113 : memref<1x128xf32, #tpu.memory_space<any>>) target(%116 : memref<1x128xf32, #tpu.memory_space<vmem>>) target_semaphore(%118 : memref<!tpu.dma_semaphore, #tpu.memory_space<semaphore_mem>>)
      %c4_i32 = arith.constant 4 : i32
      %119 = arith.addi %71, %c4_i32 : i32
      %120 = arith.index_cast %119 : i32 to index
      %121 = memref.load %arg2[%120] : memref<16xi32, #tpu.memory_space<smem>>
      %c0_i32_60 = arith.constant 0 : i32
      %122 = tpu.memref_slice %arg3[%121, %c0_i32_60] : memref<64x128xf32, #tpu.memory_space<any>> -> memref<1x128xf32, #tpu.memory_space<any>>
      %c0_i32_61 = arith.constant 0 : i32
      %c0_i32_62 = arith.constant 0 : i32
      %123 = tpu.memref_slice %arg8[%82, %c0_i32_61, %c0_i32_62] : memref<2x8x128xf32, #tpu.memory_space<vmem>> -> memref<1x8x128xf32, #tpu.memory_space<vmem>>
      %124 = tpu.memref_squeeze %123 : memref<1x8x128xf32, #tpu.memory_space<vmem>> -> memref<8x128xf32, #tpu.memory_space<vmem>>
      %c0_i32_63 = arith.constant 0 : i32
      %125 = tpu.memref_slice %124[%c4_i32, %c0_i32_63] : memref<8x128xf32, #tpu.memory_space<vmem>> -> memref<1x128xf32, #tpu.memory_space<vmem>>
      %126 = tpu.memref_slice %arg9[%82] : memref<2x!tpu.dma_semaphore, #tpu.memory_space<semaphore_mem>> -> memref<1x!tpu.dma_semaphore, #tpu.memory_space<semaphore_mem>>
      %127 = tpu.memref_squeeze %126 : memref<1x!tpu.dma_semaphore, #tpu.memory_space<semaphore_mem>> -> memref<!tpu.dma_semaphore, #tpu.memory_space<semaphore_mem>>
      tpu.enqueue_dma source(%122 : memref<1x128xf32, #tpu.memory_space<any>>) target(%125 : memref<1x128xf32, #tpu.memory_space<vmem>>) target_semaphore(%127 : memref<!tpu.dma_semaphore, #tpu.memory_space<semaphore_mem>>)
      %c5_i32 = arith.constant 5 : i32
      %128 = arith.addi %71, %c5_i32 : i32
      %129 = arith.index_cast %128 : i32 to index
      %130 = memref.load %arg2[%129] : memref<16xi32, #tpu.memory_space<smem>>
      %c0_i32_64 = arith.constant 0 : i32
      %131 = tpu.memref_slice %arg3[%130, %c0_i32_64] : memref<64x128xf32, #tpu.memory_space<any>> -> memref<1x128xf32, #tpu.memory_space<any>>
      %c0_i32_65 = arith.constant 0 : i32
      %c0_i32_66 = arith.constant 0 : i32
      %132 = tpu.memref_slice %arg8[%82, %c0_i32_65, %c0_i32_66] : memref<2x8x128xf32, #tpu.memory_space<vmem>> -> memref<1x8x128xf32, #tpu.memory_space<vmem>>
      %133 = tpu.memref_squeeze %132 : memref<1x8x128xf32, #tpu.memory_space<vmem>> -> memref<8x128xf32, #tpu.memory_space<vmem>>
      %c0_i32_67 = arith.constant 0 : i32
      %134 = tpu.memref_slice %133[%c5_i32, %c0_i32_67] : memref<8x128xf32, #tpu.memory_space<vmem>> -> memref<1x128xf32, #tpu.memory_space<vmem>>
      %135 = tpu.memref_slice %arg9[%82] : memref<2x!tpu.dma_semaphore, #tpu.memory_space<semaphore_mem>> -> memref<1x!tpu.dma_semaphore, #tpu.memory_space<semaphore_mem>>
      %136 = tpu.memref_squeeze %135 : memref<1x!tpu.dma_semaphore, #tpu.memory_space<semaphore_mem>> -> memref<!tpu.dma_semaphore, #tpu.memory_space<semaphore_mem>>
      tpu.enqueue_dma source(%131 : memref<1x128xf32, #tpu.memory_space<any>>) target(%134 : memref<1x128xf32, #tpu.memory_space<vmem>>) target_semaphore(%136 : memref<!tpu.dma_semaphore, #tpu.memory_space<semaphore_mem>>)
      %c6_i32 = arith.constant 6 : i32
      %137 = arith.addi %71, %c6_i32 : i32
      %138 = arith.index_cast %137 : i32 to index
      %139 = memref.load %arg2[%138] : memref<16xi32, #tpu.memory_space<smem>>
      %c0_i32_68 = arith.constant 0 : i32
      %140 = tpu.memref_slice %arg3[%139, %c0_i32_68] : memref<64x128xf32, #tpu.memory_space<any>> -> memref<1x128xf32, #tpu.memory_space<any>>
      %c0_i32_69 = arith.constant 0 : i32
      %c0_i32_70 = arith.constant 0 : i32
      %141 = tpu.memref_slice %arg8[%82, %c0_i32_69, %c0_i32_70] : memref<2x8x128xf32, #tpu.memory_space<vmem>> -> memref<1x8x128xf32, #tpu.memory_space<vmem>>
      %142 = tpu.memref_squeeze %141 : memref<1x8x128xf32, #tpu.memory_space<vmem>> -> memref<8x128xf32, #tpu.memory_space<vmem>>
      %c0_i32_71 = arith.constant 0 : i32
      %143 = tpu.memref_slice %142[%c6_i32, %c0_i32_71] : memref<8x128xf32, #tpu.memory_space<vmem>> -> memref<1x128xf32, #tpu.memory_space<vmem>>
      %144 = tpu.memref_slice %arg9[%82] : memref<2x!tpu.dma_semaphore, #tpu.memory_space<semaphore_mem>> -> memref<1x!tpu.dma_semaphore, #tpu.memory_space<semaphore_mem>>
      %145 = tpu.memref_squeeze %144 : memref<1x!tpu.dma_semaphore, #tpu.memory_space<semaphore_mem>> -> memref<!tpu.dma_semaphore, #tpu.memory_space<semaphore_mem>>
      tpu.enqueue_dma source(%140 : memref<1x128xf32, #tpu.memory_space<any>>) target(%143 : memref<1x128xf32, #tpu.memory_space<vmem>>) target_semaphore(%145 : memref<!tpu.dma_semaphore, #tpu.memory_space<semaphore_mem>>)
      %c7_i32 = arith.constant 7 : i32
      %146 = arith.addi %71, %c7_i32 : i32
      %147 = arith.index_cast %146 : i32 to index
      %148 = memref.load %arg2[%147] : memref<16xi32, #tpu.memory_space<smem>>
      %c0_i32_72 = arith.constant 0 : i32
      %149 = tpu.memref_slice %arg3[%148, %c0_i32_72] : memref<64x128xf32, #tpu.memory_space<any>> -> memref<1x128xf32, #tpu.memory_space<any>>
      %c0_i32_73 = arith.constant 0 : i32
      %c0_i32_74 = arith.constant 0 : i32
      %150 = tpu.memref_slice %arg8[%82, %c0_i32_73, %c0_i32_74] : memref<2x8x128xf32, #tpu.memory_space<vmem>> -> memref<1x8x128xf32, #tpu.memory_space<vmem>>
      %151 = tpu.memref_squeeze %150 : memref<1x8x128xf32, #tpu.memory_space<vmem>> -> memref<8x128xf32, #tpu.memory_space<vmem>>
      %c0_i32_75 = arith.constant 0 : i32
      %152 = tpu.memref_slice %151[%c7_i32, %c0_i32_75] : memref<8x128xf32, #tpu.memory_space<vmem>> -> memref<1x128xf32, #tpu.memory_space<vmem>>
      %153 = tpu.memref_slice %arg9[%82] : memref<2x!tpu.dma_semaphore, #tpu.memory_space<semaphore_mem>> -> memref<1x!tpu.dma_semaphore, #tpu.memory_space<semaphore_mem>>
      %154 = tpu.memref_squeeze %153 : memref<1x!tpu.dma_semaphore, #tpu.memory_space<semaphore_mem>> -> memref<!tpu.dma_semaphore, #tpu.memory_space<semaphore_mem>>
      tpu.enqueue_dma source(%149 : memref<1x128xf32, #tpu.memory_space<any>>) target(%152 : memref<1x128xf32, #tpu.memory_space<vmem>>) target_semaphore(%154 : memref<!tpu.dma_semaphore, #tpu.memory_space<semaphore_mem>>)
      %c8_i32_76 = arith.constant 8 : i32
    } else {
    }
    %c0_i32_9 = arith.constant 0 : i32
    %c0_i32_10 = arith.constant 0 : i32
    %19 = tpu.memref_slice %arg8[%11, %c0_i32_9, %c0_i32_10] : memref<2x8x128xf32, #tpu.memory_space<vmem>> -> memref<1x8x128xf32, #tpu.memory_space<vmem>>
    %20 = tpu.memref_squeeze %19 : memref<1x8x128xf32, #tpu.memory_space<vmem>> -> memref<8x128xf32, #tpu.memory_space<vmem>>
    %c0_i32_11 = arith.constant 0 : i32
    %c0_i32_12 = arith.constant 0 : i32
    %21 = tpu.memref_slice %arg8[%11, %c0_i32_11, %c0_i32_12] : memref<2x8x128xf32, #tpu.memory_space<vmem>> -> memref<1x8x128xf32, #tpu.memory_space<vmem>>
    %22 = tpu.memref_squeeze %21 : memref<1x8x128xf32, #tpu.memory_space<vmem>> -> memref<8x128xf32, #tpu.memory_space<vmem>>
    %23 = tpu.memref_slice %arg9[%11] : memref<2x!tpu.dma_semaphore, #tpu.memory_space<semaphore_mem>> -> memref<1x!tpu.dma_semaphore, #tpu.memory_space<semaphore_mem>>
    %24 = tpu.memref_squeeze %23 : memref<1x!tpu.dma_semaphore, #tpu.memory_space<semaphore_mem>> -> memref<!tpu.dma_semaphore, #tpu.memory_space<semaphore_mem>>
    tpu.wait_dma2 semaphore(%24 : memref<!tpu.dma_semaphore, #tpu.memory_space<semaphore_mem>>) src(%20 : memref<8x128xf32, #tpu.memory_space<vmem>>) dst(%22 : memref<8x128xf32, #tpu.memory_space<vmem>>)
    %c1_i32_13 = arith.constant 1 : i32
    %c0_i32_14 = arith.constant 0 : i32
    %25 = arith.cmpi eq, %c1_i32_13, %c0_i32_14 : i32
    %c1_i32_15 = arith.constant 1 : i32
    %26 = arith.select %25, %c1_i32_15, %c1_i32_13 : i32
    %27 = arith.remsi %1, %26 : i32
    %c0_i32_16 = arith.constant 0 : i32
    %28 = arith.cmpi ne, %27, %c0_i32_16 : i32
    %c0_i32_17 = arith.constant 0 : i32
    %29 = arith.cmpi slt, %27, %c0_i32_17 : i32
    %c0_i32_18 = arith.constant 0 : i32
    %30 = arith.cmpi slt, %26, %c0_i32_18 : i32
    %31 = arith.xori %29, %30 : i1
    %32 = arith.andi %31, %28 : i1
    %33 = arith.addi %27, %26 : i32
    %34 = arith.select %32, %33, %27 : i32
    %c8_i32 = arith.constant 8 : i32
    %35 = arith.muli %34, %c8_i32 : i32
    %36 = tpu.assume_multiple %35, 8 : i32
    %37 = arith.index_cast %11 : i32 to index
    %c0 = arith.constant 0 : index
    %c0_19 = arith.constant 0 : index
    %38 = vector.load %arg8[%37, %c0, %c0_19] : memref<2x8x128xf32, #tpu.memory_space<vmem>>, vector<1x8x128xf32>
    %39 = vector.shape_cast %38 : vector<1x8x128xf32> to vector<8x128xf32>
    %40 = arith.index_cast %36 : i32 to index
    %c0_20 = arith.constant 0 : index
    %41 = vector.load %arg4[%40, %c0_20] : memref<8x128xf32, #tpu.memory_space<vmem>>, vector<8x128xf32>
    %42 = arith.addf %39, %41 : vector<8x128xf32>
    %cst = arith.constant dense<0.000000e+00> : vector<8xf32>
    %43 = vector.multi_reduction <add>, %42, %cst [1] : vector<8x128xf32> to vector<8xf32>
    %44 = vector.shape_cast %43 : vector<8xf32> to vector<8x1xf32>
    %cst_21 = arith.constant 3.125000e-02 : f32
    %45 = vector.broadcast %cst_21 : f32 to vector<8x1xf32>
    %46 = arith.mulf %44, %45 : vector<8x1xf32>
    %47 = arith.mulf %42, %42 : vector<8x128xf32>
    %cst_22 = arith.constant dense<0.000000e+00> : vector<8xf32>
    %48 = vector.multi_reduction <add>, %47, %cst_22 [1] : vector<8x128xf32> to vector<8xf32>
    %49 = vector.shape_cast %48 : vector<8xf32> to vector<8x1xf32>
    %cst_23 = arith.constant 3.125000e-02 : f32
    %50 = vector.broadcast %cst_23 : f32 to vector<8x1xf32>
    %51 = arith.mulf %49, %50 : vector<8x1xf32>
    %52 = arith.mulf %46, %46 : vector<8x1xf32>
    %53 = arith.subf %51, %52 : vector<8x1xf32>
    %cst_24 = arith.constant 0.000000e+00 : f32
    %54 = vector.broadcast %cst_24 : f32 to vector<8x1xf32>
    %55 = arith.maximumf %53, %54 : vector<8x1xf32>
    %cst_25 = arith.constant 9.99999996E-13 : f32
    %56 = vector.broadcast %cst_25 : f32 to vector<8x1xf32>
    %57 = arith.addf %55, %56 : vector<8x1xf32>
    %58 = math.rsqrt %57 : vector<8x1xf32>
    %59 = vector.broadcast %46 : vector<8x1xf32> to vector<8x128xf32>
    %60 = arith.subf %42, %59 : vector<8x128xf32>
    %61 = vector.broadcast %58 : vector<8x1xf32> to vector<8x128xf32>
    %62 = arith.mulf %60, %61 : vector<8x128xf32>
    %c0_26 = arith.constant 0 : index
    %c0_27 = arith.constant 0 : index
    %63 = vector.load %arg5[%c0_26, %c0_27] : memref<1x128xf32, #tpu.memory_space<vmem>>, vector<1x128xf32>
    %64 = vector.broadcast %63 : vector<1x128xf32> to vector<8x128xf32>
    %65 = arith.mulf %64, %62 : vector<8x128xf32>
    %c0_28 = arith.constant 0 : index
    %c0_29 = arith.constant 0 : index
    %66 = vector.load %arg6[%c0_28, %c0_29] : memref<1x128xf32, #tpu.memory_space<vmem>>, vector<1x128xf32>
    %67 = vector.broadcast %66 : vector<1x128xf32> to vector<8x128xf32>
    %68 = arith.addf %65, %67 : vector<8x128xf32>
    %c0_30 = arith.constant 0 : index
    %c0_31 = arith.constant 0 : index
    %69 = vector.load %arg7[%c0_30, %c0_31] : memref<8x128xf32, #tpu.memory_space<vmem>>, vector<8x128xf32>
    tpu.vector_store %arg7[%c0_30, %c0_31], %68 {strides = array<i32>} : memref<8x128xf32, #tpu.memory_space<vmem>>, vector<8x128xf32>,
    return
  }
  func.func @transform_1(%arg0: i32, %arg1: i32, %arg2: memref<16xi32, #tpu.memory_space<smem>>) -> (i32, i32) {
    %c0_i32 = arith.constant 0 : i32
    %c0_i32_0 = arith.constant 0 : i32
    %c0_i32_1 = arith.constant 0 : i32
    return %c0_i32, %c0_i32_0 : i32, i32
  }
  func.func @transform_2(%arg0: i32, %arg1: i32, %arg2: memref<16xi32, #tpu.memory_space<smem>>) -> (i32, i32) {
    %c0_i32 = arith.constant 0 : i32
    %c0_i32_0 = arith.constant 0 : i32
    %c0_i32_1 = arith.constant 0 : i32
    return %c0_i32, %c0_i32_0 : i32, i32
  }
  func.func @transform_3(%arg0: i32, %arg1: i32, %arg2: memref<16xi32, #tpu.memory_space<smem>>) -> (i32, i32) {
    %c0_i32 = arith.constant 0 : i32
    %c0_i32_0 = arith.constant 0 : i32
    %c0_i32_1 = arith.constant 0 : i32
    return %c0_i32, %c0_i32_0 : i32, i32
  }
  func.func @transform_4(%arg0: i32, %arg1: i32, %arg2: memref<16xi32, #tpu.memory_space<smem>>) -> (i32, i32) {
    %c1_i32 = arith.constant 1 : i32
    %0 = arith.muli %arg0, %c1_i32 : i32
    %1 = arith.addi %0, %arg1 : i32
    %c0_i32 = arith.constant 0 : i32
    %c0_i32_0 = arith.constant 0 : i32
    return %1, %c0_i32 : i32, i32
  }
}

</mosaic_0001>

<llo_original>
// kernel: tpu_custom_call.1
$region0: #{tpu_custom_call.1}
  #allocation0 [shape = 'u32[]', space=smem, size = 0x4, offset = 0x4, fixed_abs, tag = 'smem constant byte address 0x4 - core index']
  #allocation1 [shape = 'u32[144,128]{1,0:T(1,128)}', space=vmem, size = 0x12000, scoped, tag = 'internal scratch']
  #allocation2 [shape = 'f32[2,8,128]{2,1,0:T(8,128)}', space=vmem, size = 0x2000, scoped, tag = 'scratch operand']
  #allocation3 [shape = 's32[2]{0}', space=sflag, size = 0x8, scoped, tag = 'scratch operand']
  #allocation4 [shape = 's32[1]{0}', space=sflag, size = 0x4, scoped, tag = 'scoped memory for tpu_custom_call.1']
  #allocation5 [shape = 'u8[512]{0}', space=smem, size = 0x200, scoped, tag = 'prefetched SMEM operand 0']
  #allocation10 [shape = 's32[]', space=sflag, size = 0x4, offset = 0, fixed_abs, tag = 'sflag constant byte address 0x0 - dummy sync flag']
  #allocation11 [shape = 's32[]', space=sflag, size = 0x4, offset = 0, fixed_abs, tag = 'sflag constant byte address 0x0 - dummy sync flag']
  #allocation12 [shape = 'u32[]', space=smem, size = 0x4, offset = 0x44, fixed_abs, tag = 'smem constant byte address 0x44 - assertion arg 0']
  #allocation13 [shape = 'u32[]', space=smem, size = 0x4, offset = 0x48, fixed_abs, tag = 'smem constant byte address 0x48 - assertion arg 1']
  #allocation14 [shape = 's32[]', space=sflag, size = 0x4, offset = 0, fixed_abs, tag = 'sflag constant byte address 0x0 - dummy sync flag']
  #allocation15 [shape = 's32[]', space=sflag, size = 0x4, offset = 0, fixed_abs, tag = 'sflag constant byte address 0x0 - dummy sync flag']
  #allocation16 [shape = 's32[]', space=sflag, size = 0x4, offset = 0, fixed_abs, tag = 'sflag constant byte address 0x0 - dummy sync flag']
  #allocation17 [shape = 's32[]', space=sflag, size = 0x4, offset = 0, fixed_abs, tag = 'sflag constant byte address 0x0 - dummy sync flag']
  #allocation18 [shape = 's32[]', space=sflag, size = 0x4, offset = 0, fixed_abs, tag = 'sflag constant byte address 0x0 - dummy sync flag']
  #allocation19 [shape = 's32[]', space=sflag, size = 0x4, offset = 0, fixed_abs, tag = 'sflag constant byte address 0x0 - dummy sync flag']
  #allocation20 [shape = 's32[]', space=sflag, size = 0x4, offset = 0, fixed_abs, tag = 'sflag constant byte address 0x0 - dummy sync flag']
  #allocation21 [shape = 's32[]', space=sflag, size = 0x4, offset = 0, fixed_abs, tag = 'sflag constant byte address 0x0 - dummy sync flag']
  #allocation22 [shape = 's32[]', space=sflag, size = 0x4, offset = 0, fixed_abs, tag = 'sflag constant byte address 0x0 - dummy sync flag']
  #allocation23 [shape = 's32[]', space=sflag, size = 0x4, offset = 0, fixed_abs, tag = 'sflag constant byte address 0x0 - dummy sync flag']
  #allocation24 [shape = 's32[]', space=sflag, size = 0x4, offset = 0, fixed_abs, tag = 'sflag constant byte address 0x0 - dummy sync flag']
  #allocation25 [shape = 's32[]', space=sflag, size = 0x4, offset = 0, fixed_abs, tag = 'sflag constant byte address 0x0 - dummy sync flag']
  #allocation26 [shape = 's32[]', space=sflag, size = 0x4, offset = 0, fixed_abs, tag = 'sflag constant byte address 0x0 - dummy sync flag']
  #allocation27 [shape = 's32[]', space=sflag, size = 0x4, offset = 0, fixed_abs, tag = 'sflag constant byte address 0x0 - dummy sync flag']
  #allocation28 [shape = 's32[]', space=sflag, size = 0x4, offset = 0, fixed_abs, tag = 'sflag constant byte address 0x0 - dummy sync flag']
  #allocation29 [shape = 's32[]', space=sflag, size = 0x4, offset = 0, fixed_abs, tag = 'sflag constant byte address 0x0 - dummy sync flag']
  #allocation30 [shape = 's32[]', space=sflag, size = 0x4, offset = 0, fixed_abs, tag = 'sflag constant byte address 0x0 - dummy sync flag']
  #allocation31 [shape = 's32[]', space=sflag, size = 0x4, offset = 0, fixed_abs, tag = 'sflag constant byte address 0x0 - dummy sync flag']
  #allocation32 [shape = 's32[]', space=sflag, size = 0x4, offset = 0, fixed_abs, tag = 'sflag constant byte address 0x0 - dummy sync flag']
  #allocation33 [shape = 's32[]', space=sflag, size = 0x4, offset = 0, fixed_abs, tag = 'sflag constant byte address 0x0 - dummy sync flag']
  #allocation34 [shape = 's32[]', space=sflag, size = 0x4, offset = 0, fixed_abs, tag = 'sflag constant byte address 0x0 - dummy sync flag']
  #allocation35 [shape = 's32[]', space=sflag, size = 0x4, offset = 0, fixed_abs, tag = 'sflag constant byte address 0x0 - dummy sync flag']
  #allocation36 [shape = 's32[]', space=sflag, size = 0x4, offset = 0, fixed_abs, tag = 'sflag constant byte address 0x0 - dummy sync flag']
  #allocation37 [shape = 's32[]', space=sflag, size = 0x4, offset = 0, fixed_abs, tag = 'sflag constant byte address 0x0 - dummy sync flag']
  #allocation38 [shape = 's32[]', space=sflag, size = 0x4, offset = 0, fixed_abs, tag = 'sflag constant byte address 0x0 - dummy sync flag']
  #allocation39 [shape = 's32[]', space=sflag, size = 0x4, offset = 0, fixed_abs, tag = 'sflag constant byte address 0x0 - dummy sync flag']
  #allocation40 [shape = 's32[]', space=sflag, size = 0x4, offset = 0, fixed_abs, tag = 'sflag constant byte address 0x0 - dummy sync flag']
  #allocation41 [shape = 's32[]', space=sflag, size = 0x4, offset = 0, fixed_abs, tag = 'sflag constant byte address 0x0 - dummy sync flag']
  #allocation42 [shape = 's32[]', space=sflag, size = 0x4, offset = 0, fixed_abs, tag = 'sflag constant byte address 0x0 - dummy sync flag']
  #allocation43 [shape = 's32[]', space=sflag, size = 0x4, offset = 0, fixed_abs, tag = 'sflag constant byte address 0x0 - dummy sync flag']
  %s0 = inlined_call_operand.hbm [shape: s32[16], index: 0, kind: input, shape index: {}]
  %s1 = inlined_call_operand.hbm [shape: f32[64,128], index: 1, kind: input, shape index: {}]
  %s2 = inlined_call_operand.hbm [shape: f32[8,128], index: 2, kind: input, shape index: {}]
  %s3 = inlined_call_operand.vmem [shape: f32[1,128], index: 3, kind: input, shape index: {}]
  %s4 = inlined_call_operand.vmem [shape: f32[1,128], index: 4, kind: input, shape index: {}]
  %s5 = inlined_call_operand.hbm [shape: f32[16,128], index: 5, kind: output, shape index: {}]
  %s6 = sld [smem:[#allocation0]]
  $region121: #{tpu_custom_call.1} parent=0
    _
  %s8 = ssub.s32 1, %s6
  %s9 = scalar_select 0, %s8, %s6
  %11 = dma.hbm_to_smem %s0, 16, [#allocation5], [#allocation4]
  %12 = dma.done [#allocation4], 16
  %13 = sfence
  $region1: #{tpu_custom_call.1} parent=0
    #allocation6 [shape = 'u8[4096]{0}', space=vmem, size = 0x1000, scoped, tag = 'input window, operand 2, single buffered']
    #allocation7 [shape = 's32[2]{0}', space=sflag, size = 0x8, scoped, tag = 'scoped memory for tpu_custom_call.1']
    #allocation8 [shape = 's32[2]{0}', space=sflag, size = 0x8, scoped, tag = 'scoped memory for tpu_custom_call.1']
    #allocation9 [shape = 'u8[8192]{0}', space=vmem, size = 0x2000, scoped, tag = 'output window, operand 0']
    %14 = vsyncpa [#allocation7], 0
    %15 = vsyncpa [#allocation8], 0
    %s16 = scalar_lea.sflag [#allocation8], 1
    %17 = vsyncpa %s16, 0
    loop: start=0, step=1, limit=4
    $region2: #{tpu_custom_call.1} parent=1 // loop_pre_header
      _
    $region3: #{tpu_custom_call.1} parent=1 // loop_header
      %s19 = sphi 0, %s23
      %p20 = scmp.ge.s32.totalorder %s19, 4
      %s26 = sphi 0, %s38
      %s27 = sphi 0, %s34
      %s28 = sphi 0, %s26
      %s29 = sphi 0, %s27
      %s30 = sphi 0, %s28
      %s31 = sphi 0, %s29
      %s39 = sphi 0, %s39
      %s41 = sphi 0, %s39
      %s42 = sphi 0, %s41
      %s56 = sphi 0, %s42
      %s60 = sphi 0, %s60
      %s62 = sphi 0, %s60
      %s63 = sphi 0, %s62
      %s77 = sphi 0, %s63
      %s81 = sphi 0, %s81
      %s83 = sphi 0, %s81
      %s84 = sphi 0, %s83
      %s98 = sphi 0, %s84
      %s106 = sphi 0, %s108
      %s109 = sphi 0, %s106
      %s110 = sphi 0, %s109
      %s126 = sphi 0, %s110
    $region4: #{tpu_custom_call.1} parent=1 // loop_header_branch
      %22 = sbr.rel (%p20) target = $region8
    $region5: #{tpu_custom_call.1} parent=1 // loop_body
      %s24 = ssub.s32 %s19, 1
      %s25 = ssub.s32 %s19, 2
      %s32 = sadd.s32 1, %s27
      %p33 = scmp.ge.s32.totalorder %s32, 1
      %s34 = scalar_select %p33, 0, %s32
      %s35 = sadd.s32 1, %s26
      %s36 = scalar_select %p33, %s35, %s26
      %p37 = scmp.ge.s32.totalorder %s36, 2
      %s38 = scalar_select %p37, 0, %s36
      %s40 = sadd.s32 %s39, 1
      %p43 = scmp.eq.s32.totalorder %s19, 1
      %p44 = scmp.ne.s32.totalorder %s39, %s41
      %p45 = scmp.eq.s32.totalorder %s19, 0
      %p46 = por %p44, %p45
      %p47 = scmp.ne.s32.totalorder %s39, %s41
      %p48 = scmp.eq.s32.totalorder %s24, 1
      %p49 = por %p47, %p48
      %p50 = scmp.ne.s32.totalorder %s41, %s42
      %p51 = scmp.eq.s32.totalorder %s24, 0
      %p52 = por %p50, %p51
      %p53 = scmp.ne.s32.totalorder %s41, %s42
      %p54 = scmp.eq.s32.totalorder %s25, 1
      %p55 = por %p53, %p54
      %p57 = scmp.ne.s32.totalorder %s42, %s56
      %p58 = scmp.eq.s32.totalorder %s25, 0
      %p59 = por %p57, %p58
      %s61 = sadd.s32 %s60, 1
      %p64 = scmp.eq.s32.totalorder %s19, 1
      %p65 = scmp.ne.s32.totalorder %s60, %s62
      %p66 = scmp.eq.s32.totalorder %s19, 0
      %p67 = por %p65, %p66
      %p68 = scmp.ne.s32.totalorder %s60, %s62
      %p69 = scmp.eq.s32.totalorder %s24, 1
      %p70 = por %p68, %p69
      %p71 = scmp.ne.s32.totalorder %s62, %s63
      %p72 = scmp.eq.s32.totalorder %s24, 0
      %p73 = por %p71, %p72
      %p74 = scmp.ne.s32.totalorder %s62, %s63
      %p75 = scmp.eq.s32.totalorder %s25, 1
      %p76 = por %p74, %p75
      %p78 = scmp.ne.s32.totalorder %s63, %s77
      %p79 = scmp.eq.s32.totalorder %s25, 0
      %p80 = por %p78, %p79
      %s82 = sadd.s32 %s81, 1
      %p85 = scmp.eq.s32.totalorder %s19, 1
      %p86 = scmp.ne.s32.totalorder %s81, %s83
      %p87 = scmp.eq.s32.totalorder %s19, 0
      %p88 = por %p86, %p87
      %p89 = scmp.ne.s32.totalorder %s81, %s83
      %p90 = scmp.eq.s32.totalorder %s24, 1
      %p91 = por %p89, %p90
      %p92 = scmp.ne.s32.totalorder %s83, %s84
      %p93 = scmp.eq.s32.totalorder %s24, 0
      %p94 = por %p92, %p93
      %p95 = scmp.ne.s32.totalorder %s83, %s84
      %p96 = scmp.eq.s32.totalorder %s25, 1
      %p97 = por %p95, %p96
      %p99 = scmp.ne.s32.totalorder %s84, %s98
      %p100 = scmp.eq.s32.totalorder %s25, 0
      %p101 = por %p99, %p100
      %s102 = sadd.s32 %s26, %s27
      %s103 = sadd.s32 %s38, %s34
      %s104 = ssub.s32 %s102, %s103
      %p105 = scmp.eq.s32.totalorder %s104, 0
      %s107 = sadd.s32 %s106, 1
      %s108 = scalar_select %p105, %s106, %s107
      %p111 = pneg %p105
      %p112 = scmp.eq.s32.totalorder %s19, 1
      %p113 = por %p111, %p112
      %p114 = scmp.ne.s32.totalorder %s106, %s109
      %p115 = scmp.eq.s32.totalorder %s19, 0
      %p116 = por %p114, %p115
      %p117 = scmp.ne.s32.totalorder %s106, %s109
      %p118 = scmp.eq.s32.totalorder %s24, 1
      %p119 = por %p117, %p118
      %p120 = scmp.ne.s32.totalorder %s109, %s110
      %p121 = scmp.eq.s32.totalorder %s24, 0
      %p122 = por %p120, %p121
      %p123 = scmp.ne.s32.totalorder %s109, %s110
      %p124 = scmp.eq.s32.totalorder %s25, 1
      %p125 = por %p123, %p124
      %p127 = scmp.ne.s32.totalorder %s110, %s126
      %p128 = scmp.eq.s32.totalorder %s25, 0
      %p129 = por %p127, %p128
      %p130 = scmp.le.s32.totalorder 1, %s19
      %p131 = scmp.lt.s32.totalorder %s19, 3
      %p132 = pnand %p130, %p131
      %p133 = pneg %p132
      // Predicated region
      $region9: #{tpu_custom_call.1} parent=5 // pred_check
        _
      $region10: #{tpu_custom_call.1} parent=5 // pred_check_branch
        %135 = sbr.rel (%p132) target = $region12
      $region11: #{tpu_custom_call.1} parent=5 // pred_region
        %s136 = ssub.s32 %s19, 1
        // Predicated region
        $region13: #{tpu_custom_call.1} parent=11 // pred_check
          %p137 = pneg %p52
        $region14: #{tpu_custom_call.1} parent=11 // pred_check_branch
          %139 = sbr.rel (%p137) target = $region16
        $region15: #{tpu_custom_call.1} parent=11 // pred_region
          %s141 = ssub.s32 128, 128
          %142 = vsyncadd [#allocation7], %s141
          %s144 = sshll.u32 [#allocation6], 4
          %s145 = int_to_ptr.vmem [resolvable:$true] %s144
          %147 = dma.hbm_to_vmem [thread:$0]  %s2, 128, %s145, [#allocation7]
        $region16: #{tpu_custom_call.1} parent=11 // pred_fallthru
          _
        // Predicated region
        $region17: #{tpu_custom_call.1} parent=11 // pred_check
          %p148 = pneg %p73
        $region18: #{tpu_custom_call.1} parent=11 // pred_check_branch
          %150 = sbr.rel (%p148) target = $region20
        $region19: #{tpu_custom_call.1} parent=11 // pred_region
          _
        $region20: #{tpu_custom_call.1} parent=11 // pred_fallthru
          _
        // Predicated region
        $region21: #{tpu_custom_call.1} parent=11 // pred_check
          %p151 = pneg %p94
        $region22: #{tpu_custom_call.1} parent=11 // pred_check_branch
          %153 = sbr.rel (%p151) target = $region24
        $region23: #{tpu_custom_call.1} parent=11 // pred_region
          _
        $region24: #{tpu_custom_call.1} parent=11 // pred_fallthru
          _
      $region12: #{tpu_custom_call.1} parent=5 // pred_fallthru
        _
      %p154 = scmp.lt.s32.totalorder %s19, 2
      // Predicated region
      $region25: #{tpu_custom_call.1} parent=5 // pred_check
        %p155 = pneg %p154
      $region26: #{tpu_custom_call.1} parent=5 // pred_check_branch
        %157 = sbr.rel (%p155) target = $region28
      $region27: #{tpu_custom_call.1} parent=5 // pred_region
        _
      $region28: #{tpu_custom_call.1} parent=5 // pred_fallthru
        _
      %p158 = scmp.le.s32.totalorder 1, %s19
      %p159 = scmp.lt.s32.totalorder %s19, 3
      %p160 = pnand %p158, %p159
      %p161 = pneg %p160
      // Predicated region
      $region29: #{tpu_custom_call.1} parent=5 // pred_check
        _
      $region30: #{tpu_custom_call.1} parent=5 // pred_check_branch
        %163 = sbr.rel (%p160) target = $region32
      $region31: #{tpu_custom_call.1} parent=5 // pred_region
        %s164 = ssub.s32 %s19, 1
        // Predicated region
        $region33: #{tpu_custom_call.1} parent=31 // pred_check
          %p165 = pneg %p52
        $region34: #{tpu_custom_call.1} parent=31 // pred_check_branch
          %167 = sbr.rel (%p165) target = $region36
        $region35: #{tpu_custom_call.1} parent=31 // pred_region
          %168 = dma.done [#allocation7], 128
        $region36: #{tpu_custom_call.1} parent=31 // pred_fallthru
          _
        %p169 = pneg %p52
        %p170 = pneg %p49
        %p171 = pneg %p73
        %p172 = pneg %p70
        %p173 = pneg %p94
        %p174 = pneg %p91
        %p175 = pneg %p122
        %p176 = pneg %p119
        %s177 = sand.u32 %s109, 1
        %s178 = scalar_lea.sflag [#allocation8], %s177
        %s179 = sand.u32 %s109, 1
        %s180 = smul.addr %s179, 8
        %s181 = scalar_lea.vmem [#allocation9], %s180
        %s182 = sadd.s32 %s28, %s29
        %s183 = sadd.s32 %s28, %s29
        %p184 = scmp.lt.s32.totalorder %s29, 0
        %s185 = ssub.s32 0, %s29
        %s186 = scalar_select %p184, %s185, %s29
        %s187 = sand.u32 %s186, 1
        %s188 = ssub.s32 0, %s187
        %s189 = scalar_select %p184, %s188, %s187
        %p190 = scmp.ne.s32.totalorder %s189, 0
        %p191 = scmp.lt.s32.totalorder %s189, 0
        %p192 = pnand %p191, %p190
        %p193 = pneg %p192
        %s194 = sadd.s32 %s189, 2
        %s195 = scalar_select %p193, %s194, %s189
        %p196 = scmp.eq.s32.totalorder %s29, 0
        // Predicated region
        $region37: #{tpu_custom_call.1} parent=31 // pred_check
          %p197 = pneg %p196
        $region38: #{tpu_custom_call.1} parent=31 // pred_check_branch
          %199 = sbr.rel (%p197) target = $region40
        $region39: #{tpu_custom_call.1} parent=31 // pred_region
          %s200 = smul.u32 %s183, 8
          %s201 = sld [smem:[#allocation5 + %s200]]
          %s202 = smul.addr %s201, 16
          %s203 = scalar_lea.hbm %s1, %s202
          %s204 = smul.u32 %s195, 8
          %s205 = scalar_lea.vmem [#allocation2], %s204
          %s206 = scalar_lea.sflag [#allocation3], %s195
          // Predicated region
          $region41: #{tpu_custom_call.1} parent=39 // pred_check
            _
          $region42: #{tpu_custom_call.1} parent=39 // pred_check_branch
            %208 = sbr.rel target = $region44
          $region43: #{tpu_custom_call.1} parent=39 // pred_region
            %209 = sst [smem:[#allocation12]] [#allocation11]
            %210 = sst [smem:[#allocation13]] [#allocation10]
          $region44: #{tpu_custom_call.1} parent=39 // pred_fallthru
            _
          %212 = shalt.err (0)
          %s214 = sshll.u32 %s205, 4
          %s215 = int_to_ptr.vmem [resolvable:$true] %s214
          %217 = dma.hbm_to_vmem [thread:$0]  %s203, 16, %s215, %s206
          %s218 = sadd.s32 %s200, 1
          %s219 = sld [smem:[#allocation5 + %s218]]
          %s220 = smul.addr %s219, 16
          %s221 = scalar_lea.hbm %s1, %s220
          %s222 = scalar_lea.vmem %s205, 1 [#allocation2]
          // Predicated region
          $region45: #{tpu_custom_call.1} parent=39 // pred_check
            _
          $region46: #{tpu_custom_call.1} parent=39 // pred_check_branch
            %224 = sbr.rel target = $region48
          $region47: #{tpu_custom_call.1} parent=39 // pred_region
            %225 = sst [smem:[#allocation12]] [#allocation15]
            %226 = sst [smem:[#allocation13]] [#allocation14]
          $region48: #{tpu_custom_call.1} parent=39 // pred_fallthru
            _
          %228 = shalt.err (0)
          %s230 = sshll.u32 %s222, 4
          %s231 = int_to_ptr.vmem [resolvable:$true] %s230
          %233 = dma.hbm_to_vmem [thread:$0]  %s221, 16, %s231, %s206
          %s234 = sadd.s32 %s200, 2
          %s235 = sld [smem:[#allocation5 + %s234]]
          %s236 = smul.addr %s235, 16
          %s237 = scalar_lea.hbm %s1, %s236
          %s238 = scalar_lea.vmem %s205, 2 [#allocation2]
          // Predicated region
          $region49: #{tpu_custom_call.1} parent=39 // pred_check
            _
          $region50: #{tpu_custom_call.1} parent=39 // pred_check_branch
            %240 = sbr.rel target = $region52
          $region51: #{tpu_custom_call.1} parent=39 // pred_region
            %241 = sst [smem:[#allocation12]] [#allocation17]
            %242 = sst [smem:[#allocation13]] [#allocation16]
          $region52: #{tpu_custom_call.1} parent=39 // pred_fallthru
            _
          %244 = shalt.err (0)
          %s246 = sshll.u32 %s238, 4
          %s247 = int_to_ptr.vmem [resolvable:$true] %s246
          %249 = dma.hbm_to_vmem [thread:$0]  %s237, 16, %s247, %s206
          %s250 = sadd.s32 %s200, 3
          %s251 = sld [smem:[#allocation5 + %s250]]
          %s252 = smul.addr %s251, 16
          %s253 = scalar_lea.hbm %s1, %s252
          %s254 = scalar_lea.vmem %s205, 3 [#allocation2]
          // Predicated region
          $region53: #{tpu_custom_call.1} parent=39 // pred_check
            _
          $region54: #{tpu_custom_call.1} parent=39 // pred_check_branch
            %256 = sbr.rel target = $region56
          $region55: #{tpu_custom_call.1} parent=39 // pred_region
            %257 = sst [smem:[#allocation12]] [#allocation19]
            %258 = sst [smem:[#allocation13]] [#allocation18]
          $region56: #{tpu_custom_call.1} parent=39 // pred_fallthru
            _
          %260 = shalt.err (0)
          %s262 = sshll.u32 %s254, 4
          %s263 = int_to_ptr.vmem [resolvable:$true] %s262
          %265 = dma.hbm_to_vmem [thread:$0]  %s253, 16, %s263, %s206
          %s266 = sadd.s32 %s200, 4
          %s267 = sld [smem:[#allocation5 + %s266]]
          %s268 = smul.addr %s267, 16
          %s269 = scalar_lea.hbm %s1, %s268
          %s270 = scalar_lea.vmem %s205, 4 [#allocation2]
          // Predicated region
          $region57: #{tpu_custom_call.1} parent=39 // pred_check
            _
          $region58: #{tpu_custom_call.1} parent=39 // pred_check_branch
            %272 = sbr.rel target = $region60
          $region59: #{tpu_custom_call.1} parent=39 // pred_region
            %273 = sst [smem:[#allocation12]] [#allocation21]
            %274 = sst [smem:[#allocation13]] [#allocation20]
          $region60: #{tpu_custom_call.1} parent=39 // pred_fallthru
            _
          %276 = shalt.err (0)
          %s278 = sshll.u32 %s270, 4
          %s279 = int_to_ptr.vmem [resolvable:$true] %s278
          %281 = dma.hbm_to_vmem [thread:$0]  %s269, 16, %s279, %s206
          %s282 = sadd.s32 %s200, 5
          %s283 = sld [smem:[#allocation5 + %s282]]
          %s284 = smul.addr %s283, 16
          %s285 = scalar_lea.hbm %s1, %s284
          %s286 = scalar_lea.vmem %s205, 5 [#allocation2]
          // Predicated region
          $region61: #{tpu_custom_call.1} parent=39 // pred_check
            _
          $region62: #{tpu_custom_call.1} parent=39 // pred_check_branch
            %288 = sbr.rel target = $region64
          $region63: #{tpu_custom_call.1} parent=39 // pred_region
            %289 = sst [smem:[#allocation12]] [#allocation23]
            %290 = sst [smem:[#allocation13]] [#allocation22]
          $region64: #{tpu_custom_call.1} parent=39 // pred_fallthru
            _
          %292 = shalt.err (0)
          %s294 = sshll.u32 %s286, 4
          %s295 = int_to_ptr.vmem [resolvable:$true] %s294
          %297 = dma.hbm_to_vmem [thread:$0]  %s285, 16, %s295, %s206
          %s298 = sadd.s32 %s200, 6
          %s299 = sld [smem:[#allocation5 + %s298]]
          %s300 = smul.addr %s299, 16
          %s301 = scalar_lea.hbm %s1, %s300
          %s302 = scalar_lea.vmem %s205, 6 [#allocation2]
          // Predicated region
          $region65: #{tpu_custom_call.1} parent=39 // pred_check
            _
          $region66: #{tpu_custom_call.1} parent=39 // pred_check_branch
            %304 = sbr.rel target = $region68
          $region67: #{tpu_custom_call.1} parent=39 // pred_region
            %305 = sst [smem:[#allocation12]] [#allocation25]
            %306 = sst [smem:[#allocation13]] [#allocation24]
          $region68: #{tpu_custom_call.1} parent=39 // pred_fallthru
            _
          %308 = shalt.err (0)
          %s310 = sshll.u32 %s302, 4
          %s311 = int_to_ptr.vmem [resolvable:$true] %s310
          %313 = dma.hbm_to_vmem [thread:$0]  %s301, 16, %s311, %s206
          %s314 = sadd.s32 %s200, 7
          %s315 = sld [smem:[#allocation5 + %s314]]
          %s316 = smul.addr %s315, 16
          %s317 = scalar_lea.hbm %s1, %s316
          %s318 = scalar_lea.vmem %s205, 7 [#allocation2]
          // Predicated region
          $region69: #{tpu_custom_call.1} parent=39 // pred_check
            _
          $region70: #{tpu_custom_call.1} parent=39 // pred_check_branch
            %320 = sbr.rel target = $region72
          $region71: #{tpu_custom_call.1} parent=39 // pred_region
            %321 = sst [smem:[#allocation12]] [#allocation27]
            %322 = sst [smem:[#allocation13]] [#allocation26]
          $region72: #{tpu_custom_call.1} parent=39 // pred_fallthru
            _
          %324 = shalt.err (0)
          %s326 = sshll.u32 %s318, 4
          %s327 = int_to_ptr.vmem [resolvable:$true] %s326
          %329 = dma.hbm_to_vmem [thread:$0]  %s317, 16, %s327, %s206
        $region40: #{tpu_custom_call.1} parent=31 // pred_fallthru
          _
        %s330 = sadd.s32 %s29, 1
        %p331 = scmp.lt.s32.totalorder %s330, 1
        // Predicated region
        $region73: #{tpu_custom_call.1} parent=31 // pred_check
          %p332 = pneg %p331
        $region74: #{tpu_custom_call.1} parent=31 // pred_check_branch
          %334 = sbr.rel (%p332) target = $region76
        $region75: #{tpu_custom_call.1} parent=31 // pred_region
          %s335 = sadd.s32 %s183, 1
          %s336 = smul.u32 %s335, 8
          %p337 = scmp.lt.s32.totalorder %s330, 0
          %s338 = ssub.s32 0, %s330
          %s339 = scalar_select %p337, %s338, %s330
          %s340 = sand.u32 %s339, 1
          %s341 = ssub.s32 0, %s340
          %s342 = scalar_select %p337, %s341, %s340
          %p343 = scmp.ne.s32.totalorder %s342, 0
          %p344 = scmp.lt.s32.totalorder %s342, 0
          %p345 = pnand %p344, %p343
          %p346 = pneg %p345
          %s347 = sadd.s32 %s342, 2
          %s348 = scalar_select %p346, %s347, %s342
          %s349 = sld [smem:[#allocation5 + %s336]]
          %s350 = smul.addr %s349, 16
          %s351 = scalar_lea.hbm %s1, %s350
          %s352 = smul.u32 %s348, 8
          %s353 = scalar_lea.vmem [#allocation2], %s352
          %s354 = scalar_lea.sflag [#allocation3], %s348
          // Predicated region
          $region77: #{tpu_custom_call.1} parent=75 // pred_check
            _
          $region78: #{tpu_custom_call.1} parent=75 // pred_check_branch
            %356 = sbr.rel target = $region80
          $region79: #{tpu_custom_call.1} parent=75 // pred_region
            %357 = sst [smem:[#allocation12]] [#allocation29]
            %358 = sst [smem:[#allocation13]] [#allocation28]
          $region80: #{tpu_custom_call.1} parent=75 // pred_fallthru
            _
          %360 = shalt.err (0)
          %s362 = sshll.u32 %s353, 4
          %s363 = int_to_ptr.vmem [resolvable:$true] %s362
          %365 = dma.hbm_to_vmem [thread:$0]  %s351, 16, %s363, %s354
          %s366 = sadd.s32 %s336, 1
          %s367 = sld [smem:[#allocation5 + %s366]]
          %s368 = smul.addr %s367, 16
          %s369 = scalar_lea.hbm %s1, %s368
          %s370 = scalar_lea.vmem %s353, 1 [#allocation2]
          // Predicated region
          $region81: #{tpu_custom_call.1} parent=75 // pred_check
            _
          $region82: #{tpu_custom_call.1} parent=75 // pred_check_branch
            %372 = sbr.rel target = $region84
          $region83: #{tpu_custom_call.1} parent=75 // pred_region
            %373 = sst [smem:[#allocation12]] [#allocation31]
            %374 = sst [smem:[#allocation13]] [#allocation30]
          $region84: #{tpu_custom_call.1} parent=75 // pred_fallthru
            _
          %376 = shalt.err (0)
          %s378 = sshll.u32 %s370, 4
          %s379 = int_to_ptr.vmem [resolvable:$true] %s378
          %381 = dma.hbm_to_vmem [thread:$0]  %s369, 16, %s379, %s354
          %s382 = sadd.s32 %s336, 2
          %s383 = sld [smem:[#allocation5 + %s382]]
          %s384 = smul.addr %s383, 16
          %s385 = scalar_lea.hbm %s1, %s384
          %s386 = scalar_lea.vmem %s353, 2 [#allocation2]
          // Predicated region
          $region85: #{tpu_custom_call.1} parent=75 // pred_check
            _
          $region86: #{tpu_custom_call.1} parent=75 // pred_check_branch
            %388 = sbr.rel target = $region88
          $region87: #{tpu_custom_call.1} parent=75 // pred_region
            %389 = sst [smem:[#allocation12]] [#allocation33]
            %390 = sst [smem:[#allocation13]] [#allocation32]
          $region88: #{tpu_custom_call.1} parent=75 // pred_fallthru
            _
          %392 = shalt.err (0)
          %s394 = sshll.u32 %s386, 4
          %s395 = int_to_ptr.vmem [resolvable:$true] %s394
          %397 = dma.hbm_to_vmem [thread:$0]  %s385, 16, %s395, %s354
          %s398 = sadd.s32 %s336, 3
          %s399 = sld [smem:[#allocation5 + %s398]]
          %s400 = smul.addr %s399, 16
          %s401 = scalar_lea.hbm %s1, %s400
          %s402 = scalar_lea.vmem %s353, 3 [#allocation2]
          // Predicated region
          $region89: #{tpu_custom_call.1} parent=75 // pred_check
            _
          $region90: #{tpu_custom_call.1} parent=75 // pred_check_branch
            %404 = sbr.rel target = $region92
          $region91: #{tpu_custom_call.1} parent=75 // pred_region
            %405 = sst [smem:[#allocation12]] [#allocation35]
            %406 = sst [smem:[#allocation13]] [#allocation34]
          $region92: #{tpu_custom_call.1} parent=75 // pred_fallthru
            _
          %408 = shalt.err (0)
          %s410 = sshll.u32 %s402, 4
          %s411 = int_to_ptr.vmem [resolvable:$true] %s410
          %413 = dma.hbm_to_vmem [thread:$0]  %s401, 16, %s411, %s354
          %s414 = sadd.s32 %s336, 4
          %s415 = sld [smem:[#allocation5 + %s414]]
          %s416 = smul.addr %s415, 16
          %s417 = scalar_lea.hbm %s1, %s416
          %s418 = scalar_lea.vmem %s353, 4 [#allocation2]
          // Predicated region
          $region93: #{tpu_custom_call.1} parent=75 // pred_check
            _
          $region94: #{tpu_custom_call.1} parent=75 // pred_check_branch
            %420 = sbr.rel target = $region96
          $region95: #{tpu_custom_call.1} parent=75 // pred_region
            %421 = sst [smem:[#allocation12]] [#allocation37]
            %422 = sst [smem:[#allocation13]] [#allocation36]
          $region96: #{tpu_custom_call.1} parent=75 // pred_fallthru
            _
          %424 = shalt.err (0)
          %s426 = sshll.u32 %s418, 4
          %s427 = int_to_ptr.vmem [resolvable:$true] %s426
          %429 = dma.hbm_to_vmem [thread:$0]  %s417, 16, %s427, %s354
          %s430 = sadd.s32 %s336, 5
          %s431 = sld [smem:[#allocation5 + %s430]]
          %s432 = smul.addr %s431, 16
          %s433 = scalar_lea.hbm %s1, %s432
          %s434 = scalar_lea.vmem %s353, 5 [#allocation2]
          // Predicated region
          $region97: #{tpu_custom_call.1} parent=75 // pred_check
            _
          $region98: #{tpu_custom_call.1} parent=75 // pred_check_branch
            %436 = sbr.rel target = $region100
          $region99: #{tpu_custom_call.1} parent=75 // pred_region
            %437 = sst [smem:[#allocation12]] [#allocation39]
            %438 = sst [smem:[#allocation13]] [#allocation38]
          $region100: #{tpu_custom_call.1} parent=75 // pred_fallthru
            _
          %440 = shalt.err (0)
          %s442 = sshll.u32 %s434, 4
          %s443 = int_to_ptr.vmem [resolvable:$true] %s442
          %445 = dma.hbm_to_vmem [thread:$0]  %s433, 16, %s443, %s354
          %s446 = sadd.s32 %s336, 6
          %s447 = sld [smem:[#allocation5 + %s446]]
          %s448 = smul.addr %s447, 16
          %s449 = scalar_lea.hbm %s1, %s448
          %s450 = scalar_lea.vmem %s353, 6 [#allocation2]
          // Predicated region
          $region101: #{tpu_custom_call.1} parent=75 // pred_check
            _
          $region102: #{tpu_custom_call.1} parent=75 // pred_check_branch
            %452 = sbr.rel target = $region104
          $region103: #{tpu_custom_call.1} parent=75 // pred_region
            %453 = sst [smem:[#allocation12]] [#allocation41]
            %454 = sst [smem:[#allocation13]] [#allocation40]
          $region104: #{tpu_custom_call.1} parent=75 // pred_fallthru
            _
          %456 = shalt.err (0)
          %s458 = sshll.u32 %s450, 4
          %s459 = int_to_ptr.vmem [resolvable:$true] %s458
          %461 = dma.hbm_to_vmem [thread:$0]  %s449, 16, %s459, %s354
          %s462 = sadd.s32 %s336, 7
          %s463 = sld [smem:[#allocation5 + %s462]]
          %s464 = smul.addr %s463, 16
          %s465 = scalar_lea.hbm %s1, %s464
          %s466 = scalar_lea.vmem %s353, 7 [#allocation2]
          // Predicated region
          $region105: #{tpu_custom_call.1} parent=75 // pred_check
            _
          $region106: #{tpu_custom_call.1} parent=75 // pred_check_branch
            %468 = sbr.rel target = $region108
          $region107: #{tpu_custom_call.1} parent=75 // pred_region
            %469 = sst [smem:[#allocation12]] [#allocation43]
            %470 = sst [smem:[#allocation13]] [#allocation42]
          $region108: #{tpu_custom_call.1} parent=75 // pred_fallthru
            _
          %472 = shalt.err (0)
          %s474 = sshll.u32 %s466, 4
          %s475 = int_to_ptr.vmem [resolvable:$true] %s474
          %477 = dma.hbm_to_vmem [thread:$0]  %s465, 16, %s475, %s354
        $region76: #{tpu_custom_call.1} parent=31 // pred_fallthru
          _
        %s478 = smul.u32 %s195, 8
        %s479 = scalar_lea.vmem [#allocation2], %s478
        %s480 = scalar_lea.sflag [#allocation3], %s195
        %s481 = smul.u32 8, 1
        %s482 = sshll.u32 %s481, 4
        %483 = dma.done %s480, %s482
        %v484 = vld [vmem:[%s479] sm:$0xff]
        %v485 = vld [vmem:[#allocation6] sm:$0xff]
        %v486 = vadd.f32 %v484, %v485
        %487 = vadd.xlane.f32.xlu0 %v486
        %v488 = vpop.xlane.xlu0 %487
        %v489 = vmul.f32 %v488, 0.03125
        %v490 = vmul.f32 %v486, %v486
        %491 = vadd.xlane.f32.xlu0 %v490
        %v492 = vpop.xlane.xlu0 %491
        %v493 = vmul.f32 %v492, 0.03125
        %v494 = vmul.f32 %v489, %v489
        %v495 = vsub.f32 %v493, %v494
        %v496 = vmax.f32 %v495, 0.0
        %v497 = vadd.f32 %v496, 1e-12
        %v498 = vrsqrt.pop %v497
        %v499 = vsub.f32 %v486, %v489
        %v500 = vmul.f32 %v499, %v498
        %v501 = vld [vmem:[%s3] sm:$0x1]
        %v503 = vlaneseq
        %v504 = vshrl.u32 %v503, 7
        %v505 = vsub.s32 0, %v504
        %v506 = vrot.slane %v501, %v505
        %v508 = vmul.f32 %v506, %v500
        %v509 = vld [vmem:[%s4] sm:$0x1]
        %v511 = vlaneseq
        %v512 = vshrl.u32 %v511, 7
        %v513 = vsub.s32 0, %v512
        %v514 = vrot.slane %v509, %v513
        %v516 = vadd.f32 %v508, %v514
        %517 = vst [vmem:[%s181] sm:$0xff] %v516
        %s518 = sand.u32 %s109, 1
        %s519 = scalar_lea.sflag [#allocation8], %s518
        %s520 = sand.u32 %s109, 1
        %s521 = smul.addr %s520, 8
        %s522 = scalar_lea.vmem [#allocation9], %s521
        // Predicated region
        $region109: #{tpu_custom_call.1} parent=31 // pred_check
          %p523 = pneg %p119
        $region110: #{tpu_custom_call.1} parent=31 // pred_check_branch
          %525 = sbr.rel (%p523) target = $region112
        $region111: #{tpu_custom_call.1} parent=31 // pred_region
          %s526 = sadd.s32 %s28, %s29
          %s528 = ssub.s32 128, 128
          %529 = vsyncadd %s519, %s528
          %s530 = smul.addr %s526, 128
          %s531 = scalar_lea.hbm %s5, %s530
          %s533 = sshll.u32 %s522, 4
          %s534 = int_to_ptr.vmem [resolvable:$true] %s533
          %536 = dma.vmem_to_hbm [thread:$0]  %s534, 128, %s531, %s519
        $region112: #{tpu_custom_call.1} parent=31 // pred_fallthru
          _
      $region32: #{tpu_custom_call.1} parent=5 // pred_fallthru
        _
      %p537 = scmp.le.s32.totalorder 2, %s19
      // Predicated region
      $region113: #{tpu_custom_call.1} parent=5 // pred_check
        %p538 = pneg %p537
      $region114: #{tpu_custom_call.1} parent=5 // pred_check_branch
        %540 = sbr.rel (%p538) target = $region116
      $region115: #{tpu_custom_call.1} parent=5 // pred_region
        %s541 = ssub.s32 %s19, 2
        // Predicated region
        $region117: #{tpu_custom_call.1} parent=115 // pred_check
          %p542 = pneg %p125
        $region118: #{tpu_custom_call.1} parent=115 // pred_check_branch
          %544 = sbr.rel (%p542) target = $region120
        $region119: #{tpu_custom_call.1} parent=115 // pred_region
          %s545 = sand.u32 %s110, 1
          %s546 = scalar_lea.sflag [#allocation8], %s545
          %s547 = sand.u32 %s110, 1
          %s548 = smul.addr %s547, 8
          %s549 = scalar_lea.vmem [#allocation9], %s548
          %550 = dma.done %s546, 128
        $region120: #{tpu_custom_call.1} parent=115 // pred_fallthru
          _
      $region116: #{tpu_custom_call.1} parent=5 // pred_fallthru
        _
    $region6: #{tpu_custom_call.1} parent=1 // loop_footer
      %s23 = sadd.s32 1, %s19
    $region7: #{tpu_custom_call.1} parent=1 // loop_footer_branch
      %18 = sbr.rel target = $region3
    $region8: #{tpu_custom_call.1} parent=1 // loop_exit
      _
    %551 = vsyncpa [#allocation7], 1
    %s552 = scalar_lea.sflag [#allocation7], 1
    %553 = vsyncpa %s552, 1
    %554 = vsyncpa [#allocation8], 1
    %s555 = scalar_lea.sflag [#allocation8], 1
    %556 = vsyncpa %s555, 1
  %557 = vsyncmov [#allocation3]
  %s558 = vpop.sfrf %557
  %p559 = scmp.eq.s32.totalorder %s558, 0
  %p560 = pneg %p559
  %562 = shalt.err (%p560)
  %s563 = scalar_lea.sflag [#allocation3], 1
  %564 = vsyncmov %s563
  %s565 = vpop.sfrf %564
  %p566 = scmp.eq.s32.totalorder %s565, 0
  %p567 = pneg %p566
  %569 = shalt.err (%p567)

</llo_original>
